<compile_context>
chip_gen: v7x
topology: tpu7x:2x2x1
jax: 0.10.0
libtpu: 0.0.40
codegen_flags: <defaults>
</compile_context>

<pallas_src>
import functools

import jax
import jax.numpy as jnp
from jax.experimental import pallas as pl
from jax.experimental.pallas import tpu as pltpu

_TILE_BUDGET_BYTES = 8 * 1024 * 1024    # per input buffer (Pallas double-buffers it)
_VMEM_LIMIT_BYTES = 32 * 1024 * 1024    # fits physical VMEM on v5e/v6e (128 MiB) and v7x (64 MiB)


def _round_up(x, m):
    return (x + m - 1) // m * m


def _sublane_multiple(dtype):
    # sub-32-bit dtypes pack along sublanes: bf16 vreg is [16,128], int8/fp8 [32,128]
    return {4: 8, 2: 16, 1: 32}.get(jnp.dtype(dtype).itemsize, 8)


def _pool_kernel_whole(x_ref, o_ref, *, inv_spatial):
    # x_ref: (tile_rows, spatial)   o_ref: (1, 1, tile_rows)  -- lane-dense output
    s = jnp.sum(x_ref[...].astype(jnp.float32), axis=-1)          # (tile_rows,)
    o_ref[...] = (s * inv_spatial).astype(o_ref.dtype).reshape(o_ref.shape)


def _pool_kernel_chunked(x_ref, o_ref, acc_ref, *, inv_spatial, rem):
    # x_ref: (tile_rows, spatial_chunk)   o_ref: (1, 1, tile_rows)
    # acc_ref: (1, tile_rows) f32 running sum, resident across the reduction axis.
    k = pl.program_id(1)
    nk = pl.num_programs(1)

    @pl.when(k == 0)
    def _():
        acc_ref[...] = jnp.zeros_like(acc_ref)

    x = x_ref[...].astype(jnp.float32)
    if rem:
        # Mask out-of-bounds columns of the (partial) last spatial chunk.
        valid = jnp.where(k == nk - 1, rem, x.shape[-1])
        col = jax.lax.broadcasted_iota(jnp.int32, x.shape, 1)
        x = jnp.where(col < valid, x, 0.0)

    acc_ref[...] += jnp.sum(x, axis=-1).reshape(acc_ref.shape)

    @pl.when(k == nk - 1)
    def _():
        o_ref[...] = (acc_ref[...] * inv_spatial).astype(o_ref.dtype).reshape(o_ref.shape)


def global_avg_pool2d(x, flatten=True, *, tile_budget_bytes=_TILE_BUDGET_BYTES):
    """Equivalent to F.adaptive_avg_pool2d(x, (1, 1)) (+ optional flatten).

    x: (N, C, H, W). Returns (N, C) if flatten else (N, C, 1, 1).
    """
    n, c, h, w = x.shape
    rows = n * c
    spatial = h * w
    dtype_bytes = jnp.dtype(x.dtype).itemsize
    sub = _sublane_multiple(x.dtype)
    spatial_lanes = _round_up(spatial, 128)       # VMEM pads the last dim to 128 lanes
    inv_spatial = float(1.0 / spatial)            # Python float -> literal, not a captured const

    x2d = x.reshape(rows, spatial)                # no jnp.pad: partial blocks handled below

    cost = pl.CostEstimate(
        flops=rows * spatial,
        transcendentals=0,
        bytes_accessed=rows * spatial * dtype_bytes + rows * dtype_bytes,
    )
    min_row_tile = min(sub, rows)

    if min_row_tile * spatial_lanes * dtype_bytes <= tile_budget_bytes:
        # ---- common path: spatial kept whole; grid over rows only ---------
        budget_rows = tile_budget_bytes // (spatial_lanes * dtype_bytes)
        if budget_rows >= rows:
            if rows >= 2 * sub:
                # >= 2 row blocks so the "parallel" axis can use both v7x TensorCores
                tile_rows = _round_up((rows + 1) // 2, sub)
            else:
                tile_rows = rows               # single block == full dim (always legal)
        else:
            tile_rows = max(sub, budget_rows // sub * sub)
        num_row_tiles = pl.cdiv(rows, tile_rows)

        out3d = pl.pallas_call(
            functools.partial(_pool_kernel_whole, inv_spatial=inv_spatial),
            out_shape=jax.ShapeDtypeStruct((num_row_tiles, 1, tile_rows), x.dtype),
            grid=(num_row_tiles,),
            in_specs=[pl.BlockSpec((tile_rows, spatial), lambda i: (i, 0))],
            out_specs=pl.BlockSpec((1, 1, tile_rows), lambda i: (i, 0, 0)),
            compiler_params=pltpu.CompilerParams(
                dimension_semantics=("parallel",),
                vmem_limit_bytes=_VMEM_LIMIT_BYTES,
            ),
            cost_estimate=cost,
        )(x2d)
    else:
        # ---- very large H*W: chunk spatial on the last (reduction) axis ----
        tile_rows = min_row_tile
        spatial_chunk = max(
            128, (tile_budget_bytes // (tile_rows * dtype_bytes)) // 128 * 128
        )
        num_row_tiles = pl.cdiv(rows, tile_rows)
        num_k = pl.cdiv(spatial, spatial_chunk)
        rem = spatial % spatial_chunk

        out3d = pl.pallas_call(
            functools.partial(_pool_kernel_chunked, inv_spatial=inv_spatial, rem=rem),
            out_shape=jax.ShapeDtypeStruct((num_row_tiles, 1, tile_rows), x.dtype),
            grid=(num_row_tiles, num_k),
            in_specs=[pl.BlockSpec((tile_rows, spatial_chunk), lambda i, k: (i, k))],
            out_specs=pl.BlockSpec((1, 1, tile_rows), lambda i, k: (i, 0, 0)),
            scratch_shapes=[pltpu.VMEM((1, tile_rows), jnp.float32)],
            compiler_params=pltpu.CompilerParams(
                dimension_semantics=("parallel", "arbitrary"),
                vmem_limit_bytes=_VMEM_LIMIT_BYTES,
            ),
            cost_estimate=cost,
        )(x2d)

    out = out3d.reshape(num_row_tiles * tile_rows)[:rows]   # drop garbage partial-block rows
    if flatten:
        return out.reshape(n, c)
    return out.reshape(n, c, 1, 1)


def _check(x, **kw):
    ref = jnp.mean(x, axis=(2, 3), keepdims=True)
    y_flat = global_avg_pool2d(x, **kw)
    y = global_avg_pool2d(x, flatten=False, **kw)
    jax.block_until_ready((y_flat, y))
    n, c = x.shape[0], x.shape[1]
    assert y_flat.shape == (n, c)
    assert y.shape == (n, c, 1, 1)
    assert jnp.allclose(y, ref, rtol=1e-5, atol=1e-6)
    assert jnp.allclose(y_flat, ref.reshape(n, c), rtol=1e-5, atol=1e-6)


if __name__ == "__main__":
    key = jax.random.PRNGKey(0)
    k1, k2, k3, k4 = jax.random.split(key, 4)

    # Default path (flatten=True, matching the PyTorch module default)
    _check(jax.random.normal(k1, (2, 4, 16, 16), dtype=jnp.float32))

    # Odd, non-aligned dims (rows=6, spatial=49): single full-dim block, no padding
    _check(jax.random.normal(k2, (2, 3, 7, 7), dtype=jnp.float32))

    # Two row blocks (megacore split path)
    _check(jax.random.normal(k3, (4, 8, 16, 16), dtype=jnp.float32))

    # Force the chunked-spatial path on small shapes (with and without remainder masking)
    _check(jax.random.normal(k4, (2, 4, 10, 20), dtype=jnp.float32),
           tile_budget_bytes=4096)   # spatial=200, chunk=128, remainder masked
    _check(jax.random.normal(k1, (2, 4, 16, 16), dtype=jnp.float32),
           tile_budget_bytes=4096)   # spatial=256, chunk=128, no remainder

    print("KERNEL_OK")
</pallas_src>

<mosaic_0001>
module attributes {stable_mosaic.version = 11 : i64} {
  func.func @_pool_kernel_whole(%arg0: i32, %arg1: memref<8x256xf32, #tpu.memory_space<vmem>>, %arg2: memref<1x1x8xf32, #tpu.memory_space<vmem>>) attributes {dimension_semantics = [#tpu.dimension_semantics<parallel>], iteration_bounds = array<i64: 1>, scalar_prefetch = 0 : i64, scratch_operands = 0 : i64, tpu.core_type = #tpu.core_type<tc>, window_params = [{transform_indices = @transform_0, window_bounds = array<i64: 8, 256>}, {transform_indices = @transform_1, window_bounds = array<i64: 1, 1, 8>}]} {
    %c0 = arith.constant 0 : index
    %c0_0 = arith.constant 0 : index
    %0 = vector.load %arg1[%c0, %c0_0] : memref<8x256xf32, #tpu.memory_space<vmem>>, vector<8x256xf32>
    %cst = arith.constant dense<0.000000e+00> : vector<8xf32>
    %1 = vector.multi_reduction <add>, %0, %cst [1] : vector<8x256xf32> to vector<8xf32>
    %cst_1 = arith.constant 3.906250e-03 : f32
    %2 = vector.broadcast %cst_1 : f32 to vector<8xf32>
    %3 = arith.mulf %1, %2 : vector<8xf32>
    %4 = vector.shape_cast %3 : vector<8xf32> to vector<1x1x8xf32>
    %c0_2 = arith.constant 0 : index
    %c0_3 = arith.constant 0 : index
    %c0_4 = arith.constant 0 : index
    %5 = vector.load %arg2[%c0_2, %c0_3, %c0_4] : memref<1x1x8xf32, #tpu.memory_space<vmem>>, vector<1x1x8xf32>
    tpu.vector_store %arg2[%c0_2, %c0_3, %c0_4], %4 {strides = array<i32>} : memref<1x1x8xf32, #tpu.memory_space<vmem>>, vector<1x1x8xf32>,
    return
  }
  func.func @transform_0(%arg0: i32) -> (i32, i32) {
    %c0_i32 = arith.constant 0 : i32
    %c0_i32_0 = arith.constant 0 : i32
    return %arg0, %c0_i32 : i32, i32
  }
  func.func @transform_1(%arg0: i32) -> (i32, i32, i32) {
    %c0_i32 = arith.constant 0 : i32
    %c0_i32_0 = arith.constant 0 : i32
    %c0_i32_1 = arith.constant 0 : i32
    return %arg0, %c0_i32, %c0_i32_0 : i32, i32, i32
  }
}

</mosaic_0001>

<llo_original>
// kernel: tpu_custom_call.1
$region0: #{tpu_custom_call.1}
  #allocation0 [shape = 'u32[]', space=smem, size = 0x4, offset = 0x4, fixed_abs, tag = 'smem constant byte address 0x4 - core index']
  #allocation1 [shape = 'u32[144,128]{1,0:T(1,128)}', space=vmem, size = 0x12000, scoped, tag = 'internal scratch']
  %s0 = inlined_call_operand.hbm [shape: f32[8,256], index: 0, kind: input, shape index: {}]
  %s1 = inlined_call_operand.hbm [shape: f32[1,1,8], index: 1, kind: output, shape index: {}]
  %s2 = sld [smem:[#allocation0]]
  $region18: #{tpu_custom_call.1} parent=0
    _
  %s4 = ssub.s32 1, %s2
  %s5 = scalar_select 0, %s4, %s2
  $region1: #{tpu_custom_call.1} parent=0
    #allocation2 [shape = 'u8[8192]{0}', space=vmem, size = 0x2000, scoped, tag = 'input window, operand 0, single buffered']
    #allocation3 [shape = 's32[1]{0}', space=sflag, size = 0x4, scoped, tag = 'scoped memory for tpu_custom_call.1']
    #allocation4 [shape = 's32[1]{0}', space=sflag, size = 0x4, scoped, tag = 'scoped memory for tpu_custom_call.1']
    #allocation5 [shape = 'u8[512]{0}', space=vmem, size = 0x400, scoped, tag = 'output window, operand 0, single buffered']
    %6 = vsyncpa [#allocation3], 0
    %7 = vsyncpa [#allocation4], 0
    // Predicated region
    $region2: #{tpu_custom_call.1} parent=1 // pred_check
      _
    $region3: #{tpu_custom_call.1} parent=1 // pred_check_branch
      %9 = sbr.rel (0) target = $region5
    $region4: #{tpu_custom_call.1} parent=1 // pred_region
      %s11 = ssub.s32 256, 256
      %12 = vsyncadd [#allocation3], %s11
      %s14 = sshll.u32 [#allocation2], 4
      %s15 = int_to_ptr.vmem [resolvable:$true] %s14
      %17 = dma.hbm_to_vmem [thread:$0]  %s0, 256, %s15, [#allocation3]
    $region5: #{tpu_custom_call.1} parent=1 // pred_fallthru
      _
    // Predicated region
    $region6: #{tpu_custom_call.1} parent=1 // pred_check
      _
    $region7: #{tpu_custom_call.1} parent=1 // pred_check_branch
      %19 = sbr.rel (0) target = $region9
    $region8: #{tpu_custom_call.1} parent=1 // pred_region
      %20 = dma.done [#allocation3], 256
    $region9: #{tpu_custom_call.1} parent=1 // pred_fallthru
      _
    %v21 = vld [vmem:[#allocation2] sm:$0xff]
    %v22 = vld [vmem:[#allocation2 + $0x8] sm:$0xff]
    %v23 = vadd.f32 %v21, %v22
    %24 = vadd.xlane.f32.xlu0 %v23
    %v25 = vpop.xlane.xlu0 %24
    %v26 = vmul.f32 %v25, 0.00390625
    %v28 = vlaneseq
    %v29 = vand.u32 %v28, 127
    %v30 = vlaneseq
    %v31 = vshrl.u32 %v30, 7
    %v32 = vsub.s32 %v29, %v31
    %v33 = vrot.slane %v26, %v32
    %vm35 = vcmask 57344
    %36 = vst.msk [vmem:[#allocation5] sm:$0x1] %vm35, %v33
    // Predicated region
    $region10: #{tpu_custom_call.1} parent=1 // pred_check
      _
    $region11: #{tpu_custom_call.1} parent=1 // pred_check_branch
      %38 = sbr.rel (0) target = $region13
    $region12: #{tpu_custom_call.1} parent=1 // pred_region
      %s40 = ssub.s32 16, 16
      %41 = vsyncadd [#allocation4], %s40
      %s43 = sshll.u32 [#allocation5], 4
      %s44 = int_to_ptr.vmem [resolvable:$true] %s43
      %46 = dma.vmem_to_hbm [thread:$0]  %s44, 16, %s1, [#allocation4]
    $region13: #{tpu_custom_call.1} parent=1 // pred_fallthru
      _
    // Predicated region
    $region14: #{tpu_custom_call.1} parent=1 // pred_check
      _
    $region15: #{tpu_custom_call.1} parent=1 // pred_check_branch
      %48 = sbr.rel (0) target = $region17
    $region16: #{tpu_custom_call.1} parent=1 // pred_region
      %49 = dma.done [#allocation4], 16
    $region17: #{tpu_custom_call.1} parent=1 // pred_fallthru
      _
    %50 = vsyncpa [#allocation3], 1
    %51 = vsyncpa [#allocation4], 1

</llo_original>
